<compile_context>
chip_gen: v5e
topology: v5e:2x2
jax: 0.10.0
libtpu: 0.0.40
codegen_flags: <defaults>
</compile_context>

<pallas_src>
import jax
import jax.numpy as jnp
from jax.experimental import pallas as pl
from jax.experimental.pallas import tpu as pltpu

NEG_SLOPE = 0.01  # PyTorch nn.LeakyReLU() default negative_slope


# ---------------------------------------------------------------------------
# Kernel: one lane-dense matmul + bias + residual + LeakyReLU per block of rows.
# ---------------------------------------------------------------------------
def tem_cnn_local_kernel(x_ref, w_ref, b_ref, o_ref):
    x = x_ref[...]                                                    # [bb, T*I*C]
    y = jnp.dot(x, w_ref[...], preferred_element_type=jnp.float32)   # [bb, T*O*4]
    y = y + b_ref[...] + x                  # bias (broadcast) + residual (O*4 == I*C layout match)
    o_ref[...] = jnp.where(y >= 0, y, NEG_SLOPE * y).astype(o_ref.dtype)


# ---------------------------------------------------------------------------
# One-time parameter packing (keep out of the per-call path).
# ---------------------------------------------------------------------------
def pack_tem_cnn_local_params(weights, biases, *, temporal_range):
    """Pack 4x Conv3d params into a single banded matmul weight + tiled bias.

    weights: 4 arrays [O, I, 1, K, C];  biases: 4 arrays [O].
    Returns:
      W_big : [T*I*C, T*O*4]  banded weight; 'same' temporal padding encoded as zero taps.
      b_full: [1, T*O*4]      bias, column (t, o, c) -> b_c[o].
    """
    O, I, _, K, C = weights[0].shape
    T = temporal_range
    pad = (K - 1) // 2

    # Wmat[k, i*C + w, o*4 + c] = W_c[o, i, 0, k, w]
    Wall = jnp.stack(weights, axis=0)                         # [4(c), O, I, 1, K, C(w)]
    Wmat = jnp.transpose(Wall[:, :, :, 0, :, :], (3, 2, 4, 1, 0)).reshape(K, I * C, O * 4)

    # Banded selector: band[t_in, t_out, k] = 1 iff t_in == t_out + k - pad (in-range taps only).
    t_in = jnp.arange(T)[:, None, None]
    t_out = jnp.arange(T)[None, :, None]
    taps = jnp.arange(K)[None, None, :]
    band = (t_in == t_out + taps - pad).astype(Wmat.dtype)    # [T, T, K]

    # W_big[t_in*IC + ic, t_out*O4 + o4] = sum_k band * Wmat
    W_big = jnp.einsum("abk,kio->aibo", band, Wmat).reshape(T * I * C, T * O * 4)

    ball = jnp.stack(biases, axis=0)                          # [4(c), O]
    bflat = jnp.transpose(ball).reshape(1, O * 4)             # column o*4+c -> b_c[o]
    b_full = jnp.tile(bflat, (1, T))                          # [1, T*O*4]
    return W_big, b_full


def _choose_block_b(B, bytes_per_row, vmem_budget_bytes):
    """Largest multiple-of-8 divisor of B that fits (double-buffered) in the VMEM budget,
    preferring >= 2 grid steps so v7x's two TensorCores both get work."""
    cands = [bb for bb in range(8, B + 1, 8) if B % bb == 0]
    if not cands:
        return B  # tiny B: single full block (full-dim block is exempt from the (8,128) rule)
    fitting = [bb for bb in cands if 2 * bb * bytes_per_row <= vmem_budget_bytes]
    if not fitting:
        fitting = [cands[0]]
    multi = [bb for bb in fitting if B // bb >= 2]
    pool = multi if multi else fitting
    return max(pool)


# ---------------------------------------------------------------------------
# Forward wrapper.
# ---------------------------------------------------------------------------
def tem_cnn_local_forward(x, W_big, b_full, *, block_b=None, vmem_budget_bytes=8 << 20):
    """x: [N, I, A, T, C] (PyTorch NCDHW).  W_big/b_full from pack_tem_cnn_local_params."""
    N, I, A, T, C = x.shape
    TIC = T * I * C
    TO4 = b_full.shape[1]
    assert W_big.shape == (TIC, TO4)
    assert TO4 == TIC and C == 4, "residual add requires output_dim == input_dim and cateNum == 4"
    O = (TO4 // T) // 4

    B = N * A
    # rows x (fully flattened, lane-dense) features; no jnp.pad — padding lives in W_big's zeros.
    x_flat = jnp.transpose(x, (0, 2, 3, 1, 4)).reshape(B, TIC)

    if block_b is None:
        bytes_per_row = (TIC + TO4) * 4                      # f32 input row + output row
        block_b = _choose_block_b(B, bytes_per_row, vmem_budget_bytes)
    assert B % block_b == 0

    out_flat = pl.pallas_call(
        tem_cnn_local_kernel,
        out_shape=jax.ShapeDtypeStruct((B, TO4), jnp.float32),
        grid=(B // block_b,),
        in_specs=[
            pl.BlockSpec((block_b, TIC), lambda i: (i, 0)),
            pl.BlockSpec((TIC, TO4), lambda i: (0, 0)),      # constant index_map: VMEM-resident
            pl.BlockSpec((1, TO4), lambda i: (0, 0)),
        ],
        out_specs=pl.BlockSpec((block_b, TO4), lambda i: (i, 0)),
        compiler_params=pltpu.CompilerParams(dimension_semantics=("parallel",)),
    )(x_flat, W_big, b_full)

    out = out_flat.reshape(N, A, T, O, 4)
    return jnp.transpose(out, (0, 3, 1, 2, 4))               # [N, O, A, T, 4]


# ---------------------------------------------------------------------------
# Pure-JAX reference mirroring the PyTorch module (eval mode).
# ---------------------------------------------------------------------------
def reference_forward(x, weights, biases, pad):
    outs = []
    for wc, bc in zip(weights, biases):
        y = jax.lax.conv_general_dilated(
            x, wc, window_strides=(1, 1, 1),
            padding=((0, 0), (pad, pad), (0, 0)),
            dimension_numbers=("NCDHW", "OIDHW", "NCDHW"))
        outs.append(y + bc.reshape(1, -1, 1, 1, 1))
    cat = jnp.concatenate(outs, axis=-1)
    z = cat + x
    return jnp.where(z >= 0, z, NEG_SLOPE * z)


if __name__ == "__main__":
    # Small shapes consistent with the module: cateNum = 4, kernelSize = 3,
    # input_dim = output_dim = 4 (residual), areaNum = 8, temporalRange = 16, batch = 2.
    N, input_dim, output_dim = 2, 4, 4
    areaNum, temporalRange, cateNum = 8, 16, 4
    kernelSize = 3
    pad = (kernelSize - 1) // 2

    key = jax.random.PRNGKey(0)
    kx, *kws = jax.random.split(key, 1 + 8)
    x = jax.random.normal(kx, (N, input_dim, areaNum, temporalRange, cateNum), jnp.float32)

    weights, biases = [], []
    for c in range(4):
        w = 0.1 * jax.random.normal(
            kws[2 * c], (output_dim, input_dim, 1, kernelSize, cateNum), jnp.float32)
        b = 0.1 * jax.random.normal(kws[2 * c + 1], (output_dim,), jnp.float32)
        weights.append(w)
        biases.append(b)

    # Pack once (not in the per-call path).
    W_big, b_full = pack_tem_cnn_local_params(weights, biases, temporal_range=temporalRange)

    out = tem_cnn_local_forward(x, W_big, b_full)
    out = jax.block_until_ready(out)

    ref = reference_forward(x, weights, biases, pad)
    assert out.shape == (N, output_dim, areaNum, temporalRange, 4)
    assert jnp.allclose(out, ref, atol=1e-4, rtol=1e-4), "mismatch vs reference"

    print("KERNEL_OK")
</pallas_src>

<mosaic_0001>
module attributes {stable_mosaic.version = 11 : i64} {
  func.func @tem_cnn_local_kernel(%arg0: i32, %arg1: memref<8x256xf32, #tpu.memory_space<vmem>>, %arg2: memref<256x256xf32, #tpu.memory_space<vmem>>, %arg3: memref<1x256xf32, #tpu.memory_space<vmem>>, %arg4: memref<8x256xf32, #tpu.memory_space<vmem>>) attributes {dimension_semantics = [#tpu.dimension_semantics<parallel>], iteration_bounds = array<i64: 2>, scalar_prefetch = 0 : i64, scratch_operands = 0 : i64, tpu.core_type = #tpu.core_type<tc>, window_params = [{transform_indices = @transform_0, window_bounds = array<i64: 8, 256>}, {pipeline_mode = #tpu.pipeline_mode<synchronous>, transform_indices = @transform_1, window_bounds = array<i64: 256, 256>}, {pipeline_mode = #tpu.pipeline_mode<synchronous>, transform_indices = @transform_2, window_bounds = array<i64: 1, 256>}, {transform_indices = @transform_3, window_bounds = array<i64: 8, 256>}]} {
    %c0 = arith.constant 0 : index
    %c0_0 = arith.constant 0 : index
    %0 = vector.load %arg1[%c0, %c0_0] : memref<8x256xf32, #tpu.memory_space<vmem>>, vector<8x256xf32>
    %c0_1 = arith.constant 0 : index
    %c0_2 = arith.constant 0 : index
    %1 = vector.load %arg2[%c0_1, %c0_2] : memref<256x256xf32, #tpu.memory_space<vmem>>, vector<256x256xf32>
    %cst = arith.constant dense<0.000000e+00> : vector<8x256xf32>
    %2 = tpu.matmul %0, %1, %cst {dimension_numbers = #tpu.dot_dimension_numbers<[1], [0], [0], [1], [0, 0, 1, 1], [], []>} : vector<8x256xf32>, vector<256x256xf32>, vector<8x256xf32> -> vector<8x256xf32>
    %c0_3 = arith.constant 0 : index
    %c0_4 = arith.constant 0 : index
    %3 = vector.load %arg3[%c0_3, %c0_4] : memref<1x256xf32, #tpu.memory_space<vmem>>, vector<1x256xf32>
    %4 = vector.broadcast %3 : vector<1x256xf32> to vector<8x256xf32>
    %5 = arith.addf %2, %4 : vector<8x256xf32>
    %6 = arith.addf %5, %0 : vector<8x256xf32>
    %cst_5 = arith.constant 0.000000e+00 : f32
    %7 = vector.broadcast %cst_5 : f32 to vector<8x256xf32>
    %8 = arith.cmpf oge, %6, %7 : vector<8x256xf32>
    %cst_6 = arith.constant 0.00999999977 : f32
    %9 = vector.broadcast %cst_6 : f32 to vector<8x256xf32>
    %10 = arith.mulf %9, %6 : vector<8x256xf32>
    %11 = arith.select %8, %6, %10 : vector<8x256xi1>, vector<8x256xf32>
    %c0_7 = arith.constant 0 : index
    %c0_8 = arith.constant 0 : index
    %12 = vector.load %arg4[%c0_7, %c0_8] : memref<8x256xf32, #tpu.memory_space<vmem>>, vector<8x256xf32>
    tpu.vector_store %arg4[%c0_7, %c0_8], %11 {strides = array<i32>} : memref<8x256xf32, #tpu.memory_space<vmem>>, vector<8x256xf32>,
    return
  }
  func.func @transform_0(%arg0: i32) -> (i32, i32) {
    %c0_i32 = arith.constant 0 : i32
    %c0_i32_0 = arith.constant 0 : i32
    return %arg0, %c0_i32 : i32, i32
  }
  func.func @transform_1(%arg0: i32) -> (i32, i32) {
    %c0_i32 = arith.constant 0 : i32
    %c0_i32_0 = arith.constant 0 : i32
    %c0_i32_1 = arith.constant 0 : i32
    return %c0_i32, %c0_i32_0 : i32, i32
  }
  func.func @transform_2(%arg0: i32) -> (i32, i32) {
    %c0_i32 = arith.constant 0 : i32
    %c0_i32_0 = arith.constant 0 : i32
    %c0_i32_1 = arith.constant 0 : i32
    return %c0_i32, %c0_i32_0 : i32, i32
  }
  func.func @transform_3(%arg0: i32) -> (i32, i32) {
    %c0_i32 = arith.constant 0 : i32
    %c0_i32_0 = arith.constant 0 : i32
    return %arg0, %c0_i32 : i32, i32
  }
}

</mosaic_0001>

<llo_original>
// kernel: tpu_custom_call.1
$region0: #{tpu_custom_call.1}
  #allocation0 [shape = 'u32[]', space=smem, size = 0x4, offset = 0x4, fixed_abs, tag = 'smem constant byte address 0x4 - core index']
  #allocation1 [shape = 'u32[72,128]{1,0:T(1,128)}', space=vmem, size = 0x9000, scoped, tag = 'internal scratch']
  %s0 = inlined_call_operand.hbm [shape: f32[16,256], index: 0, kind: input, shape index: {}]
  %s1 = inlined_call_operand.hbm [shape: f32[256,256], index: 1, kind: input, shape index: {}]
  %s2 = inlined_call_operand.hbm [shape: f32[1,256], index: 2, kind: input, shape index: {}]
  %s3 = inlined_call_operand.hbm [shape: f32[16,256], index: 3, kind: output, shape index: {}]
  %s4 = sld [smem:[#allocation0]]
  $region57: #{tpu_custom_call.1} parent=0
    _
  %s6 = ssub.s32 1, %s4
  %s7 = scalar_select 0, %s6, %s4
  $region1: #{tpu_custom_call.1} parent=0
    #allocation2 [shape = 'u8[16384]{0}', space=vmem, size = 0x4000, scoped, tag = 'input window, operand 0']
    #allocation3 [shape = 's32[2]{0}', space=sflag, size = 0x8, scoped, tag = 'scoped memory for tpu_custom_call.1']
    #allocation4 [shape = 's32[2]{0}', space=sflag, size = 0x8, scoped, tag = 'scoped memory for tpu_custom_call.1']
    #allocation5 [shape = 'u8[262144]{0}', space=vmem, size = 0x40000, scoped, tag = 'input window, operand 1, single buffered']
    #allocation6 [shape = 's32[1]{0}', space=sflag, size = 0x4, scoped, tag = 'scoped memory for tpu_custom_call.1']
    #allocation7 [shape = 'u8[1024]{0}', space=vmem, size = 0x400, scoped, tag = 'input window, operand 2, single buffered']
    #allocation8 [shape = 'u8[16384]{0}', space=vmem, size = 0x4000, scoped, tag = 'output window, operand 0']
    %8 = vsyncpa [#allocation3], 0
    %s9 = scalar_lea.sflag [#allocation3], 1
    %10 = vsyncpa %s9, 0
    %11 = vsyncpa [#allocation6], 0
    %12 = vsyncpa [#allocation4], 0
    %s13 = scalar_lea.sflag [#allocation4], 1
    %14 = vsyncpa %s13, 0
    loop: start=0, step=1, limit=4
    $region2: #{tpu_custom_call.1} parent=1 // loop_pre_header
      _
    $region3: #{tpu_custom_call.1} parent=1 // loop_header
      %s16 = sphi 0, %s20
      %p17 = scmp.ge.s32.totalorder %s16, 4
      %s26 = sphi 0, %s28
      %s29 = sphi 0, %s26
      %s30 = sphi 0, %s29
      %s46 = sphi 0, %s30
      %s50 = sphi 0, %s50
      %s52 = sphi 0, %s50
      %s53 = sphi 0, %s52
      %s67 = sphi 0, %s53
      %s71 = sphi 0, %s71
      %s73 = sphi 0, %s71
      %s74 = sphi 0, %s73
      %s88 = sphi 0, %s74
      %s94 = sphi 0, %s96
      %s97 = sphi 0, %s94
      %s98 = sphi 0, %s97
      %s114 = sphi 0, %s98
    $region4: #{tpu_custom_call.1} parent=1 // loop_header_branch
      %19 = sbr.rel (%p17) target = $region8
    $region5: #{tpu_custom_call.1} parent=1 // loop_body
      %s21 = ssub.s32 %s16, 1
      %s22 = ssub.s32 %s16, 2
      %s23 = sadd.s32 %s16, 1
      %s24 = ssub.s32 %s16, %s23
      %p25 = scmp.eq.s32.totalorder %s24, 0
      %s27 = sadd.s32 %s26, 1
      %s28 = scalar_select %p25, %s26, %s27
      %p31 = pneg %p25
      %p32 = scmp.eq.s32.totalorder %s16, 1
      %p33 = por %p31, %p32
      %p34 = scmp.ne.s32.totalorder %s26, %s29
      %p35 = scmp.eq.s32.totalorder %s16, 0
      %p36 = por %p34, %p35
      %p37 = scmp.ne.s32.totalorder %s26, %s29
      %p38 = scmp.eq.s32.totalorder %s21, 1
      %p39 = por %p37, %p38
      %p40 = scmp.ne.s32.totalorder %s29, %s30
      %p41 = scmp.eq.s32.totalorder %s21, 0
      %p42 = por %p40, %p41
      %p43 = scmp.ne.s32.totalorder %s29, %s30
      %p44 = scmp.eq.s32.totalorder %s22, 1
      %p45 = por %p43, %p44
      %p47 = scmp.ne.s32.totalorder %s30, %s46
      %p48 = scmp.eq.s32.totalorder %s22, 0
      %p49 = por %p47, %p48
      %s51 = sadd.s32 %s50, 1
      %p54 = scmp.eq.s32.totalorder %s16, 1
      %p55 = scmp.ne.s32.totalorder %s50, %s52
      %p56 = scmp.eq.s32.totalorder %s16, 0
      %p57 = por %p55, %p56
      %p58 = scmp.ne.s32.totalorder %s50, %s52
      %p59 = scmp.eq.s32.totalorder %s21, 1
      %p60 = por %p58, %p59
      %p61 = scmp.ne.s32.totalorder %s52, %s53
      %p62 = scmp.eq.s32.totalorder %s21, 0
      %p63 = por %p61, %p62
      %p64 = scmp.ne.s32.totalorder %s52, %s53
      %p65 = scmp.eq.s32.totalorder %s22, 1
      %p66 = por %p64, %p65
      %p68 = scmp.ne.s32.totalorder %s53, %s67
      %p69 = scmp.eq.s32.totalorder %s22, 0
      %p70 = por %p68, %p69
      %s72 = sadd.s32 %s71, 1
      %p75 = scmp.eq.s32.totalorder %s16, 1
      %p76 = scmp.ne.s32.totalorder %s71, %s73
      %p77 = scmp.eq.s32.totalorder %s16, 0
      %p78 = por %p76, %p77
      %p79 = scmp.ne.s32.totalorder %s71, %s73
      %p80 = scmp.eq.s32.totalorder %s21, 1
      %p81 = por %p79, %p80
      %p82 = scmp.ne.s32.totalorder %s73, %s74
      %p83 = scmp.eq.s32.totalorder %s21, 0
      %p84 = por %p82, %p83
      %p85 = scmp.ne.s32.totalorder %s73, %s74
      %p86 = scmp.eq.s32.totalorder %s22, 1
      %p87 = por %p85, %p86
      %p89 = scmp.ne.s32.totalorder %s74, %s88
      %p90 = scmp.eq.s32.totalorder %s22, 0
      %p91 = por %p89, %p90
      %s92 = ssub.s32 %s16, %s23
      %p93 = scmp.eq.s32.totalorder %s92, 0
      %s95 = sadd.s32 %s94, 1
      %s96 = scalar_select %p93, %s94, %s95
      %p99 = pneg %p93
      %p100 = scmp.eq.s32.totalorder %s16, 1
      %p101 = por %p99, %p100
      %p102 = scmp.ne.s32.totalorder %s94, %s97
      %p103 = scmp.eq.s32.totalorder %s16, 0
      %p104 = por %p102, %p103
      %p105 = scmp.ne.s32.totalorder %s94, %s97
      %p106 = scmp.eq.s32.totalorder %s21, 1
      %p107 = por %p105, %p106
      %p108 = scmp.ne.s32.totalorder %s97, %s98
      %p109 = scmp.eq.s32.totalorder %s21, 0
      %p110 = por %p108, %p109
      %p111 = scmp.ne.s32.totalorder %s97, %s98
      %p112 = scmp.eq.s32.totalorder %s22, 1
      %p113 = por %p111, %p112
      %p115 = scmp.ne.s32.totalorder %s98, %s114
      %p116 = scmp.eq.s32.totalorder %s22, 0
      %p117 = por %p115, %p116
      %p118 = scmp.le.s32.totalorder 1, %s16
      %p119 = scmp.lt.s32.totalorder %s16, 3
      %p120 = pnand %p118, %p119
      %p121 = pneg %p120
      // Predicated region
      $region9: #{tpu_custom_call.1} parent=5 // pred_check
        _
      $region10: #{tpu_custom_call.1} parent=5 // pred_check_branch
        %123 = sbr.rel (%p120) target = $region12
      $region11: #{tpu_custom_call.1} parent=5 // pred_region
        %s124 = ssub.s32 %s16, 1
        // Predicated region
        $region13: #{tpu_custom_call.1} parent=11 // pred_check
          %p125 = pneg %p63
        $region14: #{tpu_custom_call.1} parent=11 // pred_check_branch
          %127 = sbr.rel (%p125) target = $region16
        $region15: #{tpu_custom_call.1} parent=11 // pred_region
          %129 = vsyncadd [#allocation6], 0
          %s130 = sshll.u32 %s1, 4
          %s131 = int_to_ptr.hbm [resolvable:$true] %s130
          %s132 = sshll.u32 [#allocation5], 4
          %s133 = int_to_ptr.vmem [resolvable:$true] %s132
          %138 = dma.hbm_to_vmem [thread:$0]  %s131, 8192, %s133, [#allocation6], 256, 256, 16
        $region16: #{tpu_custom_call.1} parent=11 // pred_fallthru
          _
        // Predicated region
        $region17: #{tpu_custom_call.1} parent=11 // pred_check
          %p139 = pneg %p84
        $region18: #{tpu_custom_call.1} parent=11 // pred_check_branch
          %141 = sbr.rel (%p139) target = $region20
        $region19: #{tpu_custom_call.1} parent=11 // pred_region
          %143 = vsyncadd [#allocation6], 0
          %s145 = sshll.u32 %s2, 4
          %s146 = int_to_ptr.hbm [resolvable:$true] %s145
          %s147 = sshll.u32 [#allocation7], 4
          %s148 = int_to_ptr.vmem [resolvable:$true] %s147
          %150 = dma.hbm_to_vmem [thread:$0]  %s146, 32, %s148, [#allocation6]
        $region20: #{tpu_custom_call.1} parent=11 // pred_fallthru
          _
      $region12: #{tpu_custom_call.1} parent=5 // pred_fallthru
        _
      %p151 = scmp.lt.s32.totalorder %s16, 2
      // Predicated region
      $region21: #{tpu_custom_call.1} parent=5 // pred_check
        %p152 = pneg %p151
      $region22: #{tpu_custom_call.1} parent=5 // pred_check_branch
        %154 = sbr.rel (%p152) target = $region24
      $region23: #{tpu_custom_call.1} parent=5 // pred_region
        // Predicated region
        $region25: #{tpu_custom_call.1} parent=23 // pred_check
          %p155 = pneg %p36
        $region26: #{tpu_custom_call.1} parent=23 // pred_check_branch
          %157 = sbr.rel (%p155) target = $region28
        $region27: #{tpu_custom_call.1} parent=23 // pred_region
          %s158 = sand.u32 %s26, 1
          %s159 = scalar_lea.sflag [#allocation3], %s158
          %s160 = sand.u32 %s26, 1
          %s161 = smul.addr %s160, 16
          %s162 = scalar_lea.vmem [#allocation2], %s161
          %164 = vsyncadd %s159, 0
          %s165 = smul.addr %s16, 2
          %s166 = smul.addr %s165, 8
          %s167 = scalar_lea.hbm %s0, %s166
          %s169 = sshll.u32 %s167, 4
          %s170 = int_to_ptr.hbm [resolvable:$true] %s169
          %s171 = sshll.u32 %s162, 4
          %s172 = int_to_ptr.vmem [resolvable:$true] %s171
          %174 = dma.hbm_to_vmem [thread:$0]  %s170, 256, %s172, %s159
        $region28: #{tpu_custom_call.1} parent=23 // pred_fallthru
          _
      $region24: #{tpu_custom_call.1} parent=5 // pred_fallthru
        _
      %p175 = scmp.le.s32.totalorder 1, %s16
      %p176 = scmp.lt.s32.totalorder %s16, 3
      %p177 = pnand %p175, %p176
      %p178 = pneg %p177
      // Predicated region
      $region29: #{tpu_custom_call.1} parent=5 // pred_check
        _
      $region30: #{tpu_custom_call.1} parent=5 // pred_check_branch
        %180 = sbr.rel (%p177) target = $region32
      $region31: #{tpu_custom_call.1} parent=5 // pred_region
        %s181 = ssub.s32 %s16, 1
        %s182 = sand.u32 %s29, 1
        %s183 = scalar_lea.sflag [#allocation3], %s182
        %s184 = sand.u32 %s29, 1
        %s185 = smul.addr %s184, 16
        %s186 = scalar_lea.vmem [#allocation2], %s185
        // Predicated region
        $region33: #{tpu_custom_call.1} parent=31 // pred_check
          %p187 = pneg %p42
        $region34: #{tpu_custom_call.1} parent=31 // pred_check_branch
          %189 = sbr.rel (%p187) target = $region36
        $region35: #{tpu_custom_call.1} parent=31 // pred_region
          %191 = dma.done %s183, 256
        $region36: #{tpu_custom_call.1} parent=31 // pred_fallthru
          _
        // Predicated region
        $region37: #{tpu_custom_call.1} parent=31 // pred_check
          %p192 = pneg %p63
        $region38: #{tpu_custom_call.1} parent=31 // pred_check_branch
          %194 = sbr.rel (%p192) target = $region40
        $region39: #{tpu_custom_call.1} parent=31 // pred_region
          %196 = dma.done [#allocation6], 8192
        $region40: #{tpu_custom_call.1} parent=31 // pred_fallthru
          _
        // Predicated region
        $region41: #{tpu_custom_call.1} parent=31 // pred_check
          %p197 = pneg %p84
        $region42: #{tpu_custom_call.1} parent=31 // pred_check_branch
          %199 = sbr.rel (%p197) target = $region44
        $region43: #{tpu_custom_call.1} parent=31 // pred_region
          %201 = dma.done [#allocation6], 32
        $region44: #{tpu_custom_call.1} parent=31 // pred_fallthru
          _
        %s202 = sand.u32 %s29, 1
        %s203 = scalar_lea.sflag [#allocation3], %s202
        %s204 = sand.u32 %s29, 1
        %s205 = smul.addr %s204, 16
        %s206 = scalar_lea.vmem [#allocation2], %s205
        %p207 = pneg %p42
        %p208 = pneg %p39
        %p209 = pneg %p63
        %p210 = pneg %p60
        %p211 = pneg %p84
        %p212 = pneg %p81
        %p213 = pneg %p110
        %p214 = pneg %p107
        %s215 = sand.u32 %s97, 1
        %s216 = scalar_lea.sflag [#allocation4], %s215
        %s217 = sand.u32 %s97, 1
        %s218 = smul.addr %s217, 16
        %s219 = scalar_lea.vmem [#allocation8], %s218
        %v220 = vld [vmem:[%s186] sm:$0xff]
        %v221 = vld [vmem:[%s186 + $0x8] sm:$0xff]
        %v222 = vld [vmem:[#allocation5] sm:$0xff]
        %v223 = vld [vmem:[#allocation5 + $0x8] sm:$0xff]
        %v224 = vld [vmem:[#allocation5 + $0x10] sm:$0xff]
        %v225 = vld [vmem:[#allocation5 + $0x18] sm:$0xff]
        %v226 = vld [vmem:[#allocation5 + $0x20] sm:$0xff]
        %v227 = vld [vmem:[#allocation5 + $0x28] sm:$0xff]
        %v228 = vld [vmem:[#allocation5 + $0x30] sm:$0xff]
        %v229 = vld [vmem:[#allocation5 + $0x38] sm:$0xff]
        %v230 = vld [vmem:[#allocation5 + $0x40] sm:$0xff]
        %v231 = vld [vmem:[#allocation5 + $0x48] sm:$0xff]
        %v232 = vld [vmem:[#allocation5 + $0x50] sm:$0xff]
        %v233 = vld [vmem:[#allocation5 + $0x58] sm:$0xff]
        %v234 = vld [vmem:[#allocation5 + $0x60] sm:$0xff]
        %v235 = vld [vmem:[#allocation5 + $0x68] sm:$0xff]
        %v236 = vld [vmem:[#allocation5 + $0x70] sm:$0xff]
        %v237 = vld [vmem:[#allocation5 + $0x78] sm:$0xff]
        %v238 = vld [vmem:[#allocation5 + $0x80] sm:$0xff]
        %v239 = vld [vmem:[#allocation5 + $0x88] sm:$0xff]
        %v240 = vld [vmem:[#allocation5 + $0x90] sm:$0xff]
        %v241 = vld [vmem:[#allocation5 + $0x98] sm:$0xff]
        %v242 = vld [vmem:[#allocation5 + $0xa0] sm:$0xff]
        %v243 = vld [vmem:[#allocation5 + $0xa8] sm:$0xff]
        %v244 = vld [vmem:[#allocation5 + $0xb0] sm:$0xff]
        %v245 = vld [vmem:[#allocation5 + $0xb8] sm:$0xff]
        %v246 = vld [vmem:[#allocation5 + $0xc0] sm:$0xff]
        %v247 = vld [vmem:[#allocation5 + $0xc8] sm:$0xff]
        %v248 = vld [vmem:[#allocation5 + $0xd0] sm:$0xff]
        %v249 = vld [vmem:[#allocation5 + $0xd8] sm:$0xff]
        %v250 = vld [vmem:[#allocation5 + $0xe0] sm:$0xff]
        %v251 = vld [vmem:[#allocation5 + $0xe8] sm:$0xff]
        %v252 = vld [vmem:[#allocation5 + $0xf0] sm:$0xff]
        %v253 = vld [vmem:[#allocation5 + $0xf8] sm:$0xff]
        %v254 = vld [vmem:[#allocation5 + $0x100] sm:$0xff]
        %v255 = vld [vmem:[#allocation5 + $0x108] sm:$0xff]
        %v256 = vld [vmem:[#allocation5 + $0x110] sm:$0xff]
        %v257 = vld [vmem:[#allocation5 + $0x118] sm:$0xff]
        %v258 = vld [vmem:[#allocation5 + $0x120] sm:$0xff]
        %v259 = vld [vmem:[#allocation5 + $0x128] sm:$0xff]
        %v260 = vld [vmem:[#allocation5 + $0x130] sm:$0xff]
        %v261 = vld [vmem:[#allocation5 + $0x138] sm:$0xff]
        %v262 = vld [vmem:[#allocation5 + $0x140] sm:$0xff]
        %v263 = vld [vmem:[#allocation5 + $0x148] sm:$0xff]
        %v264 = vld [vmem:[#allocation5 + $0x150] sm:$0xff]
        %v265 = vld [vmem:[#allocation5 + $0x158] sm:$0xff]
        %v266 = vld [vmem:[#allocation5 + $0x160] sm:$0xff]
        %v267 = vld [vmem:[#allocation5 + $0x168] sm:$0xff]
        %v268 = vld [vmem:[#allocation5 + $0x170] sm:$0xff]
        %v269 = vld [vmem:[#allocation5 + $0x178] sm:$0xff]
        %v270 = vld [vmem:[#allocation5 + $0x180] sm:$0xff]
        %v271 = vld [vmem:[#allocation5 + $0x188] sm:$0xff]
        %v272 = vld [vmem:[#allocation5 + $0x190] sm:$0xff]
        %v273 = vld [vmem:[#allocation5 + $0x198] sm:$0xff]
        %v274 = vld [vmem:[#allocation5 + $0x1a0] sm:$0xff]
        %v275 = vld [vmem:[#allocation5 + $0x1a8] sm:$0xff]
        %v276 = vld [vmem:[#allocation5 + $0x1b0] sm:$0xff]
        %v277 = vld [vmem:[#allocation5 + $0x1b8] sm:$0xff]
        %v278 = vld [vmem:[#allocation5 + $0x1c0] sm:$0xff]
        %v279 = vld [vmem:[#allocation5 + $0x1c8] sm:$0xff]
        %v280 = vld [vmem:[#allocation5 + $0x1d0] sm:$0xff]
        %v281 = vld [vmem:[#allocation5 + $0x1d8] sm:$0xff]
        %v282 = vld [vmem:[#allocation5 + $0x1e0] sm:$0xff]
        %v283 = vld [vmem:[#allocation5 + $0x1e8] sm:$0xff]
        %v284 = vld [vmem:[#allocation5 + $0x1f0] sm:$0xff]
        %v285 = vld [vmem:[#allocation5 + $0x1f8] sm:$0xff]
        %v286 = vld [vmem:[#allocation7] sm:$0x3]
        %v288 = vperm.slane %v286, 0
        %v289 = vperm.slane %v286, 1
        %292 = vmatpush.msra.mxu0 %v252
        %293 = vmatpush.msra.mxu0 %v250
        %294 = vmatpush.msra.mxu0 %v248
        %295 = vmatpush.msra.mxu0 %v246
        %296 = vmatpush.msra.mxu0 %v244
        %297 = vmatpush.msra.mxu0 %v242
        %298 = vmatpush.msra.mxu0 %v240
        %299 = vmatpush.msra.mxu0 %v238
        %300 = vmatpush.msra.mxu0 %v236
        %301 = vmatpush.msra.mxu0 %v234
        %302 = vmatpush.msra.mxu0 %v232
        %303 = vmatpush.msra.mxu0 %v230
        %304 = vmatpush.msra.mxu0 %v228
        %305 = vmatpush.msra.mxu0 %v226
        %306 = vmatpush.msra.mxu0 %v224
        %307 = vmatpush.msra.mxu0 %v222
        %308 = vmatmul.f32.gmra.mxu0 %v220
        %v309 = vpop.f32.mrf.mxu0
        %v310 = vadd.f32 %v288, %v309
        %311 = vdwg.mxu0
        %312 = vmatpush.msra.mxu0 %v284
        %313 = vmatpush.msra.mxu0 %v282
        %314 = vmatpush.msra.mxu0 %v280
        %315 = vmatpush.msra.mxu0 %v278
        %316 = vmatpush.msra.mxu0 %v276
        %317 = vmatpush.msra.mxu0 %v274
        %318 = vmatpush.msra.mxu0 %v272
        %319 = vmatpush.msra.mxu0 %v270
        %320 = vmatpush.msra.mxu0 %v268
        %321 = vmatpush.msra.mxu0 %v266
        %322 = vmatpush.msra.mxu0 %v264
        %323 = vmatpush.msra.mxu0 %v262
        %324 = vmatpush.msra.mxu0 %v260
        %325 = vmatpush.msra.mxu0 %v258
        %326 = vmatpush.msra.mxu0 %v256
        %327 = vmatpush.msra.mxu0 %v254
        %328 = vmatmul.f32.gmra.mxu0 %v221
        %v329 = vpop.f32.mrf.mxu0
        %v330 = vadd.f32 %v310, %v329
        %331 = vdwg.mxu0
        %332 = vmatpush.msra.mxu0 %v253
        %333 = vmatpush.msra.mxu0 %v251
        %334 = vmatpush.msra.mxu0 %v249
        %335 = vmatpush.msra.mxu0 %v247
        %336 = vmatpush.msra.mxu0 %v245
        %337 = vmatpush.msra.mxu0 %v243
        %338 = vmatpush.msra.mxu0 %v241
        %339 = vmatpush.msra.mxu0 %v239
        %340 = vmatpush.msra.mxu0 %v237
        %341 = vmatpush.msra.mxu0 %v235
        %342 = vmatpush.msra.mxu0 %v233
        %343 = vmatpush.msra.mxu0 %v231
        %344 = vmatpush.msra.mxu0 %v229
        %345 = vmatpush.msra.mxu0 %v227
        %346 = vmatpush.msra.mxu0 %v225
        %347 = vmatpush.msra.mxu0 %v223
        %348 = vmatmul.f32.gmra.mxu0 %v220
        %v349 = vpop.f32.mrf.mxu0
        %v350 = vadd.f32 %v289, %v349
        %351 = vdwg.mxu0
        %352 = vmatpush.msra.mxu0 %v285
        %353 = vmatpush.msra.mxu0 %v283
        %354 = vmatpush.msra.mxu0 %v281
        %355 = vmatpush.msra.mxu0 %v279
        %356 = vmatpush.msra.mxu0 %v277
        %357 = vmatpush.msra.mxu0 %v275
        %358 = vmatpush.msra.mxu0 %v273
        %359 = vmatpush.msra.mxu0 %v271
        %360 = vmatpush.msra.mxu0 %v269
        %361 = vmatpush.msra.mxu0 %v267
        %362 = vmatpush.msra.mxu0 %v265
        %363 = vmatpush.msra.mxu0 %v263
        %364 = vmatpush.msra.mxu0 %v261
        %365 = vmatpush.msra.mxu0 %v259
        %366 = vmatpush.msra.mxu0 %v257
        %367 = vmatpush.msra.mxu0 %v255
        %368 = vmatmul.f32.gmra.mxu0 %v221
        %v369 = vpop.f32.mrf.mxu0
        %v370 = vadd.f32 %v350, %v369
        %371 = vdwg.mxu0
        %v372 = vadd.f32 %v330, %v220
        %v373 = vadd.f32 %v370, %v221
        %vm374 = vcmp.ge.f32.partialorder %v372, 0.0
        %vm375 = vcmp.ge.f32.partialorder %v373, 0.0
        %v376 = vmul.f32 %v372, 0.01
        %v377 = vmul.f32 %v373, 0.01
        %v378 = vsel %vm374, %v372, %v376
        %v379 = vsel %vm375, %v373, %v377
        %380 = vst [vmem:[%s219] sm:$0xff] %v378
        %381 = vst [vmem:[%s219 + $0x8] sm:$0xff] %v379
        %s382 = sand.u32 %s97, 1
        %s383 = scalar_lea.sflag [#allocation4], %s382
        %s384 = sand.u32 %s97, 1
        %s385 = smul.addr %s384, 16
        %s386 = scalar_lea.vmem [#allocation8], %s385
        // Predicated region
        $region45: #{tpu_custom_call.1} parent=31 // pred_check
          %p387 = pneg %p107
        $region46: #{tpu_custom_call.1} parent=31 // pred_check_branch
          %389 = sbr.rel (%p387) target = $region48
        $region47: #{tpu_custom_call.1} parent=31 // pred_region
          %391 = vsyncadd %s383, 0
          %s392 = smul.addr %s21, 2
          %s393 = smul.addr %s392, 8
          %s394 = scalar_lea.hbm %s3, %s393
          %s396 = sshll.u32 %s386, 4
          %s397 = int_to_ptr.vmem [resolvable:$true] %s396
          %s398 = sshll.u32 %s394, 4
          %s399 = int_to_ptr.hbm [resolvable:$true] %s398
          %401 = dma.vmem_to_hbm [thread:$0]  %s397, 256, %s399, %s383
        $region48: #{tpu_custom_call.1} parent=31 // pred_fallthru
          _
      $region32: #{tpu_custom_call.1} parent=5 // pred_fallthru
        _
      %p402 = scmp.le.s32.totalorder 2, %s16
      // Predicated region
      $region49: #{tpu_custom_call.1} parent=5 // pred_check
        %p403 = pneg %p402
      $region50: #{tpu_custom_call.1} parent=5 // pred_check_branch
        %405 = sbr.rel (%p403) target = $region52
      $region51: #{tpu_custom_call.1} parent=5 // pred_region
        %s406 = ssub.s32 %s16, 2
        // Predicated region
        $region53: #{tpu_custom_call.1} parent=51 // pred_check
          %p407 = pneg %p113
        $region54: #{tpu_custom_call.1} parent=51 // pred_check_branch
          %409 = sbr.rel (%p407) target = $region56
        $region55: #{tpu_custom_call.1} parent=51 // pred_region
          %s410 = sand.u32 %s98, 1
          %s411 = scalar_lea.sflag [#allocation4], %s410
          %s412 = sand.u32 %s98, 1
          %s413 = smul.addr %s412, 16
          %s414 = scalar_lea.vmem [#allocation8], %s413
          %416 = dma.done %s411, 256
        $region56: #{tpu_custom_call.1} parent=51 // pred_fallthru
          _
      $region52: #{tpu_custom_call.1} parent=5 // pred_fallthru
        _
    $region6: #{tpu_custom_call.1} parent=1 // loop_footer
      %s20 = sadd.s32 1, %s16
    $region7: #{tpu_custom_call.1} parent=1 // loop_footer_branch
      %15 = sbr.rel target = $region3
    $region8: #{tpu_custom_call.1} parent=1 // loop_exit
      _
    %417 = vsyncpa [#allocation3], 1
    %s418 = scalar_lea.sflag [#allocation3], 1
    %419 = vsyncpa %s418, 1
    %420 = vsyncpa [#allocation6], 1
    %421 = vsyncpa [#allocation4], 1
    %s422 = scalar_lea.sflag [#allocation4], 1
    %423 = vsyncpa %s422, 1

</llo_original>
